<compile_context>
chip_gen: v6e
topology: v6e:2x2x1
jax: 0.10.0
libtpu: 0.0.40
codegen_flags: <defaults>
</compile_context>

<pallas_src>
import jax
import jax.numpy as jnp
from jax.experimental import pallas as pl
from jax.experimental.pallas import tpu as pltpu

INPUT_SIZE = 28
HIDDEN_SIZE = 128
OUTPUT_SIZE = 10


def rnn_kernel(x_ref, wih_ref, whh_ref, head_ref, out_ref):
    """Whole RNN forward in one invocation (everything resident in VMEM).

    x_ref:    (T*B, I)   bf16, time-major, batch padded to a multiple of 8
    wih_ref:  (I, H)     bf16, transposed vs PyTorch
    whh_ref:  (H, H)     bf16
    head_ref: (8+H, W)   f32 slab: row 0 = b_ih+b_hh, row 1 = b_out (padded),
                         rows 8:8+H = W_out (lanes padded to W >= 128)
    out_ref:  (B, O_pad) f32, lane-dense
    """
    B = out_ref.shape[0]
    T = x_ref.shape[0] // B
    H = whh_ref.shape[0]
    O_pad = out_ref.shape[1]

    b_comb = head_ref[0:1, :H]          # (1, H)   hidden bias (b_ih + b_hh)
    b_out = head_ref[1:2, :O_pad]       # (1, O_pad)
    w_out = head_ref[8:8 + H, :O_pad]   # (H, O_pad)

    # Hoisted input projection: one bf16 MXU matmul, f32 accumulation, bias
    # folded in.  Kept as an SSA value (8 vregs) -- no scratch round-trip.
    xw = jnp.dot(x_ref[...], wih_ref[...],
                 preferred_element_type=jnp.float32) + b_comb   # (T*B, H) f32

    whh = whh_ref[...]                  # bf16, hoisted load, loop-invariant
    # TODO(synk): per perf review, if the bundle dump shows a per-step weight
    # push for this stationary 128x128 RHS, drive the MXU explicitly
    # (pltpu.matmul_push_rhs once before the loop + matmul_acc_lhs /
    # matmul_pop per step; on v5e also stage W_out on a second MXU) to shave
    # ~(T-1)*fill cycles off the serial h-chain.

    # Serial recurrence: only cast(h) -> MXU -> add -> tanh on the critical
    # path.  T is small and static, so fully unroll with static slices.
    h = jnp.zeros((B, H), jnp.float32)
    for t in range(T):
        pre = xw[t * B:(t + 1) * B, :] + jnp.dot(
            h.astype(whh.dtype), whh, preferred_element_type=jnp.float32)
        h = jnp.tanh(pre)

    # Linear head in f32 (single small matmul, off the per-step chain),
    # lane-dense unmasked store.
    out_ref[...] = (jnp.dot(h, w_out, preferred_element_type=jnp.float32)
                    + b_out).astype(out_ref.dtype)


@jax.jit
def rnn_forward(x_btI, w_ih, w_hh, b_comb, w_out, b_out):
    """x_btI: (B, T, I) batch_first, like the PyTorch module."""
    B, T, I = x_btI.shape
    H = w_ih.shape[1]
    O = w_out.shape[1]

    B_pad = max(8, -(-B // 8) * 8)          # f32 sublane tile alignment
    O_pad = max(128, -(-O // 128) * 128)    # lane-dense output store
    W = max(H, O_pad)                       # shared lane width of the slab

    # Tiny (few-KiB) layout plumbing, fused by XLA: time-major + batch pad +
    # flatten to (T*B, I) so all in-kernel slices are layout no-ops; bf16
    # casts for the MXU operands of the projection and the recurrence.
    x_tb = jnp.transpose(x_btI, (1, 0, 2))
    x_tb = jnp.pad(x_tb, ((0, 0), (0, B_pad - B), (0, 0)))
    x_flat = x_tb.reshape(T * B_pad, I).astype(jnp.bfloat16)

    # One f32 slab holding both biases and the head weight (fewer DMAs).
    head = jnp.zeros((8 + H, W), jnp.float32)
    head = head.at[0, :H].set(b_comb.reshape(H))
    head = head.at[1, :O].set(b_out.reshape(O))
    head = head.at[8:8 + H, :O].set(w_out)

    # TODO(synk): for large batches on v7x, add a leading B-tile grid axis
    # marked "parallel" so the 2 TensorCores split the batch and the per-core
    # working set stays well under the 32 MiB scoped VMEM; pointless at B=2.
    out = pl.pallas_call(
        rnn_kernel,
        out_shape=jax.ShapeDtypeStruct((B_pad, O_pad), jnp.float32),
        in_specs=[pl.BlockSpec(memory_space=pltpu.MemorySpace.VMEM)] * 4,
        out_specs=pl.BlockSpec(memory_space=pltpu.MemorySpace.VMEM),
    )(x_flat, w_ih.astype(jnp.bfloat16), w_hh.astype(jnp.bfloat16), head)
    return out[:B, :O]


def reference_forward(x_btI, w_ih, w_hh, b_comb, w_out, b_out):
    """Pure-JAX f32 reference with PyTorch semantics (correctness check)."""
    B, T, I = x_btI.shape
    H = w_ih.shape[1]
    h = jnp.zeros((B, H), jnp.float32)
    for t in range(T):
        h = jnp.tanh(x_btI[:, t, :] @ w_ih + h @ w_hh + b_comb)
    return h @ w_out + b_out


if __name__ == "__main__":
    key = jax.random.PRNGKey(0)
    k_x, k_wih, k_whh, k_bih, k_bhh, k_wo, k_bo = jax.random.split(key, 7)

    B, T = 2, 8  # small batch, short sequence
    # PyTorch-style uniform init U(-1/sqrt(H), 1/sqrt(H)); shapes transposed
    # to (in, out) so the kernel can do x @ W directly.
    bound = 1.0 / jnp.sqrt(jnp.float32(HIDDEN_SIZE))
    w_ih = jax.random.uniform(k_wih, (INPUT_SIZE, HIDDEN_SIZE), jnp.float32,
                              -bound, bound)
    w_hh = jax.random.uniform(k_whh, (HIDDEN_SIZE, HIDDEN_SIZE), jnp.float32,
                              -bound, bound)
    b_ih = jax.random.uniform(k_bih, (HIDDEN_SIZE,), jnp.float32, -bound, bound)
    b_hh = jax.random.uniform(k_bhh, (HIDDEN_SIZE,), jnp.float32, -bound, bound)
    b_comb = (b_ih + b_hh).reshape(1, HIDDEN_SIZE)
    w_out = jax.random.uniform(k_wo, (HIDDEN_SIZE, OUTPUT_SIZE), jnp.float32,
                               -bound, bound)
    b_out = jax.random.uniform(k_bo, (OUTPUT_SIZE,), jnp.float32,
                               -bound, bound).reshape(1, OUTPUT_SIZE)

    x = jax.random.normal(k_x, (B, T, INPUT_SIZE), jnp.float32)

    out = jax.block_until_ready(rnn_forward(x, w_ih, w_hh, b_comb, w_out, b_out))

    ref = reference_forward(x, w_ih, w_hh, b_comb, w_out, b_out)
    assert out.shape == (B, OUTPUT_SIZE)
    # bf16 MXU operands (f32 accumulation) => loosened tolerance vs f32 ref.
    assert jnp.allclose(out, ref, atol=2e-2, rtol=2e-2), "mismatch vs reference"

    print("KERNEL_OK")
</pallas_src>

<mosaic_0001>
module attributes {stable_mosaic.version = 11 : i64} {
  func.func @rnn_kernel(%arg0: memref<64x28xbf16, #tpu.memory_space<vmem>>, %arg1: memref<28x128xbf16, #tpu.memory_space<vmem>>, %arg2: memref<128x128xbf16, #tpu.memory_space<vmem>>, %arg3: memref<136x128xf32, #tpu.memory_space<vmem>>, %arg4: memref<8x128xf32, #tpu.memory_space<vmem>>) attributes {dimension_semantics = [], scalar_prefetch = 0 : i64, scratch_operands = 0 : i64, tpu.core_type = #tpu.core_type<tc>} {
    %c0 = arith.constant 0 : index
    %c0_0 = arith.constant 0 : index
    %0 = vector.load %arg3[%c0, %c0_0] : memref<136x128xf32, #tpu.memory_space<vmem>>, vector<1x128xf32>
    %c1 = arith.constant 1 : index
    %c0_1 = arith.constant 0 : index
    %1 = vector.load %arg3[%c1, %c0_1] : memref<136x128xf32, #tpu.memory_space<vmem>>, vector<1x128xf32>
    %c8 = arith.constant 8 : index
    %c0_2 = arith.constant 0 : index
    %2 = vector.load %arg3[%c8, %c0_2] : memref<136x128xf32, #tpu.memory_space<vmem>>, vector<128x128xf32>
    %c0_3 = arith.constant 0 : index
    %c0_4 = arith.constant 0 : index
    %3 = vector.load %arg0[%c0_3, %c0_4] : memref<64x28xbf16, #tpu.memory_space<vmem>>, vector<64x28xbf16>
    %c0_5 = arith.constant 0 : index
    %c0_6 = arith.constant 0 : index
    %4 = vector.load %arg1[%c0_5, %c0_6] : memref<28x128xbf16, #tpu.memory_space<vmem>>, vector<28x128xbf16>
    %cst = arith.constant dense<0.000000e+00> : vector<64x128xf32>
    %5 = tpu.matmul %3, %4, %cst {dimension_numbers = #tpu.dot_dimension_numbers<[1], [0], [0], [1], [0, 0, 1, 1], [], []>} : vector<64x28xbf16>, vector<28x128xbf16>, vector<64x128xf32> -> vector<64x128xf32>
    %6 = vector.broadcast %0 : vector<1x128xf32> to vector<64x128xf32>
    %7 = arith.addf %5, %6 : vector<64x128xf32>
    %c0_7 = arith.constant 0 : index
    %c0_8 = arith.constant 0 : index
    %8 = vector.load %arg2[%c0_7, %c0_8] : memref<128x128xbf16, #tpu.memory_space<vmem>>, vector<128x128xbf16>
    %cst_9 = arith.constant 0.000000e+00 : f32
    %9 = vector.broadcast %cst_9 : f32 to vector<8x128xf32>
    %10 = vector.extract_strided_slice %7 {offsets = [0, 0], sizes = [8, 128], strides = [1, 1]} : vector<64x128xf32> to vector<8x128xf32>
    %11 = arith.truncf %9 : vector<8x128xf32> to vector<8x128xbf16>
    %cst_10 = arith.constant dense<0.000000e+00> : vector<8x128xf32>
    %12 = tpu.matmul %11, %8, %cst_10 {dimension_numbers = #tpu.dot_dimension_numbers<[1], [0], [0], [1], [0, 0, 1, 1], [], []>} : vector<8x128xbf16>, vector<128x128xbf16>, vector<8x128xf32> -> vector<8x128xf32>
    %13 = arith.addf %10, %12 : vector<8x128xf32>
    %14 = math.tanh %13 : vector<8x128xf32>
    %15 = vector.extract_strided_slice %7 {offsets = [8, 0], sizes = [8, 128], strides = [1, 1]} : vector<64x128xf32> to vector<8x128xf32>
    %16 = arith.truncf %14 : vector<8x128xf32> to vector<8x128xbf16>
    %cst_11 = arith.constant dense<0.000000e+00> : vector<8x128xf32>
    %17 = tpu.matmul %16, %8, %cst_11 {dimension_numbers = #tpu.dot_dimension_numbers<[1], [0], [0], [1], [0, 0, 1, 1], [], []>} : vector<8x128xbf16>, vector<128x128xbf16>, vector<8x128xf32> -> vector<8x128xf32>
    %18 = arith.addf %15, %17 : vector<8x128xf32>
    %19 = math.tanh %18 : vector<8x128xf32>
    %20 = vector.extract_strided_slice %7 {offsets = [16, 0], sizes = [8, 128], strides = [1, 1]} : vector<64x128xf32> to vector<8x128xf32>
    %21 = arith.truncf %19 : vector<8x128xf32> to vector<8x128xbf16>
    %cst_12 = arith.constant dense<0.000000e+00> : vector<8x128xf32>
    %22 = tpu.matmul %21, %8, %cst_12 {dimension_numbers = #tpu.dot_dimension_numbers<[1], [0], [0], [1], [0, 0, 1, 1], [], []>} : vector<8x128xbf16>, vector<128x128xbf16>, vector<8x128xf32> -> vector<8x128xf32>
    %23 = arith.addf %20, %22 : vector<8x128xf32>
    %24 = math.tanh %23 : vector<8x128xf32>
    %25 = vector.extract_strided_slice %7 {offsets = [24, 0], sizes = [8, 128], strides = [1, 1]} : vector<64x128xf32> to vector<8x128xf32>
    %26 = arith.truncf %24 : vector<8x128xf32> to vector<8x128xbf16>
    %cst_13 = arith.constant dense<0.000000e+00> : vector<8x128xf32>
    %27 = tpu.matmul %26, %8, %cst_13 {dimension_numbers = #tpu.dot_dimension_numbers<[1], [0], [0], [1], [0, 0, 1, 1], [], []>} : vector<8x128xbf16>, vector<128x128xbf16>, vector<8x128xf32> -> vector<8x128xf32>
    %28 = arith.addf %25, %27 : vector<8x128xf32>
    %29 = math.tanh %28 : vector<8x128xf32>
    %30 = vector.extract_strided_slice %7 {offsets = [32, 0], sizes = [8, 128], strides = [1, 1]} : vector<64x128xf32> to vector<8x128xf32>
    %31 = arith.truncf %29 : vector<8x128xf32> to vector<8x128xbf16>
    %cst_14 = arith.constant dense<0.000000e+00> : vector<8x128xf32>
    %32 = tpu.matmul %31, %8, %cst_14 {dimension_numbers = #tpu.dot_dimension_numbers<[1], [0], [0], [1], [0, 0, 1, 1], [], []>} : vector<8x128xbf16>, vector<128x128xbf16>, vector<8x128xf32> -> vector<8x128xf32>
    %33 = arith.addf %30, %32 : vector<8x128xf32>
    %34 = math.tanh %33 : vector<8x128xf32>
    %35 = vector.extract_strided_slice %7 {offsets = [40, 0], sizes = [8, 128], strides = [1, 1]} : vector<64x128xf32> to vector<8x128xf32>
    %36 = arith.truncf %34 : vector<8x128xf32> to vector<8x128xbf16>
    %cst_15 = arith.constant dense<0.000000e+00> : vector<8x128xf32>
    %37 = tpu.matmul %36, %8, %cst_15 {dimension_numbers = #tpu.dot_dimension_numbers<[1], [0], [0], [1], [0, 0, 1, 1], [], []>} : vector<8x128xbf16>, vector<128x128xbf16>, vector<8x128xf32> -> vector<8x128xf32>
    %38 = arith.addf %35, %37 : vector<8x128xf32>
    %39 = math.tanh %38 : vector<8x128xf32>
    %40 = vector.extract_strided_slice %7 {offsets = [48, 0], sizes = [8, 128], strides = [1, 1]} : vector<64x128xf32> to vector<8x128xf32>
    %41 = arith.truncf %39 : vector<8x128xf32> to vector<8x128xbf16>
    %cst_16 = arith.constant dense<0.000000e+00> : vector<8x128xf32>
    %42 = tpu.matmul %41, %8, %cst_16 {dimension_numbers = #tpu.dot_dimension_numbers<[1], [0], [0], [1], [0, 0, 1, 1], [], []>} : vector<8x128xbf16>, vector<128x128xbf16>, vector<8x128xf32> -> vector<8x128xf32>
    %43 = arith.addf %40, %42 : vector<8x128xf32>
    %44 = math.tanh %43 : vector<8x128xf32>
    %45 = vector.extract_strided_slice %7 {offsets = [56, 0], sizes = [8, 128], strides = [1, 1]} : vector<64x128xf32> to vector<8x128xf32>
    %46 = arith.truncf %44 : vector<8x128xf32> to vector<8x128xbf16>
    %cst_17 = arith.constant dense<0.000000e+00> : vector<8x128xf32>
    %47 = tpu.matmul %46, %8, %cst_17 {dimension_numbers = #tpu.dot_dimension_numbers<[1], [0], [0], [1], [0, 0, 1, 1], [], []>} : vector<8x128xbf16>, vector<128x128xbf16>, vector<8x128xf32> -> vector<8x128xf32>
    %48 = arith.addf %45, %47 : vector<8x128xf32>
    %49 = math.tanh %48 : vector<8x128xf32>
    %cst_18 = arith.constant dense<0.000000e+00> : vector<8x128xf32>
    %50 = tpu.matmul %49, %2, %cst_18 {dimension_numbers = #tpu.dot_dimension_numbers<[1], [0], [0], [1], [0, 0, 1, 1], [], []>} : vector<8x128xf32>, vector<128x128xf32>, vector<8x128xf32> -> vector<8x128xf32>
    %51 = vector.broadcast %1 : vector<1x128xf32> to vector<8x128xf32>
    %52 = arith.addf %50, %51 : vector<8x128xf32>
    %c0_19 = arith.constant 0 : index
    %c0_20 = arith.constant 0 : index
    %53 = vector.load %arg4[%c0_19, %c0_20] : memref<8x128xf32, #tpu.memory_space<vmem>>, vector<8x128xf32>
    tpu.vector_store %arg4[%c0_19, %c0_20], %52 {strides = array<i32>} : memref<8x128xf32, #tpu.memory_space<vmem>>, vector<8x128xf32>,
    return
  }
}

</mosaic_0001>

<llo_original>
// kernel: rnn_forward.1
$region0: #{rnn_forward.1}
  #allocation0 [shape = 'u32[]', space=smem, size = 0x4, offset = 0x4, fixed_abs, tag = 'smem constant byte address 0x4 - core index']
  #allocation1 [shape = 'u32[144,128]{1,0:T(1,128)}', space=vmem, size = 0x12000, scoped, tag = 'internal scratch']
  %s0 = inlined_call_operand.vmem [shape: bf16[64,28], index: 0, kind: input, shape index: {}]
  %s1 = inlined_call_operand.vmem [shape: bf16[28,128], index: 1, kind: input, shape index: {}]
  %s2 = inlined_call_operand.vmem [shape: bf16[128,128], index: 2, kind: input, shape index: {}]
  %s3 = inlined_call_operand.vmem [shape: f32[136,128], index: 3, kind: input, shape index: {}]
  %s4 = inlined_call_operand.vmem [shape: f32[8,128], index: 4, kind: output, shape index: {}]
  %s5 = sld [smem:[#allocation0]]
  $region26: #{rnn_forward.1} parent=0
    _
  %s7 = ssub.s32 1, %s5
  %s8 = scalar_select 0, %s7, %s5
  // Predicated region
  $region2: #{rnn_forward.1} parent=0 // pred_check
    _
  $region3: #{rnn_forward.1} parent=0 // pred_check_branch
    %10 = sbr.rel (0) target = $region5
  $region4: #{rnn_forward.1} parent=0 // pred_region
    _
  $region5: #{rnn_forward.1} parent=0 // pred_fallthru
    _
  // Predicated region
  $region6: #{rnn_forward.1} parent=0 // pred_check
    _
  $region7: #{rnn_forward.1} parent=0 // pred_check_branch
    %12 = sbr.rel (0) target = $region9
  $region8: #{rnn_forward.1} parent=0 // pred_region
    _
  $region9: #{rnn_forward.1} parent=0 // pred_fallthru
    _
  // Predicated region
  $region10: #{rnn_forward.1} parent=0 // pred_check
    _
  $region11: #{rnn_forward.1} parent=0 // pred_check_branch
    %14 = sbr.rel (0) target = $region13
  $region12: #{rnn_forward.1} parent=0 // pred_region
    _
  $region13: #{rnn_forward.1} parent=0 // pred_fallthru
    _
  // Predicated region
  $region14: #{rnn_forward.1} parent=0 // pred_check
    _
  $region15: #{rnn_forward.1} parent=0 // pred_check_branch
    %16 = sbr.rel (0) target = $region17
  $region16: #{rnn_forward.1} parent=0 // pred_region
    _
  $region17: #{rnn_forward.1} parent=0 // pred_fallthru
    _
  %v18 = vld [vmem:[%s3] sm:$0x1]
  %v19 = vld [vmem:[%s3 + $0x1] sm:$0x1]
  %v20 = vld [vmem:[%s3 + $0x8] sm:$0xff]
  %v21 = vld [vmem:[%s3 + $0x10] sm:$0xff]
  %v22 = vld [vmem:[%s3 + $0x18] sm:$0xff]
  %v23 = vld [vmem:[%s3 + $0x20] sm:$0xff]
  %v24 = vld [vmem:[%s3 + $0x28] sm:$0xff]
  %v25 = vld [vmem:[%s3 + $0x30] sm:$0xff]
  %v26 = vld [vmem:[%s3 + $0x38] sm:$0xff]
  %v27 = vld [vmem:[%s3 + $0x40] sm:$0xff]
  %v28 = vld [vmem:[%s3 + $0x48] sm:$0xff]
  %v29 = vld [vmem:[%s3 + $0x50] sm:$0xff]
  %v30 = vld [vmem:[%s3 + $0x58] sm:$0xff]
  %v31 = vld [vmem:[%s3 + $0x60] sm:$0xff]
  %v32 = vld [vmem:[%s3 + $0x68] sm:$0xff]
  %v33 = vld [vmem:[%s3 + $0x70] sm:$0xff]
  %v34 = vld [vmem:[%s3 + $0x78] sm:$0xff]
  %v35 = vld [vmem:[%s3 + $0x80] sm:$0xff]
  %v36 = vld [vmem:[%s0] sm:$0xf]
  %v37 = vld [vmem:[%s0 + $0x4] sm:$0xf]
  %v38 = vld [vmem:[%s0 + $0x8] sm:$0xf]
  %v39 = vld [vmem:[%s0 + $0xc] sm:$0xf]
  %v40 = vld [vmem:[%s0 + $0x10] sm:$0xf]
  %v41 = vld [vmem:[%s0 + $0x14] sm:$0xf]
  %v42 = vld [vmem:[%s0 + $0x18] sm:$0xf]
  %v43 = vld [vmem:[%s0 + $0x1c] sm:$0xf]
  %v44 = vld [vmem:[%s1] sm:$0xf]
  %v45 = vld [vmem:[%s1 + $0x4] sm:$0xf]
  %v46 = vld [vmem:[%s1 + $0x8] sm:$0xf]
  %v47 = vld [vmem:[%s1 + $0xc] sm:$0x3]
  %v48 = vlaneseq
  %v49 = vshrl.u32 %v48, 7
  %v50 = vsub.s32 0, %v49
  %v51 = vrot.slane %v18, %v50
  %v60 = vunpack.c.l.b16 %v36
  %v61 = vunpack.c.l.b16 %v37
  %v62 = vunpack.c.l.b16 %v38
  %v63 = vunpack.c.l.b16 %v39
  %v64 = vunpack.c.l.b16 %v40
  %v65 = vunpack.c.l.b16 %v41
  %v66 = vunpack.c.l.b16 %v42
  %v67 = vunpack.c.l.b16 %v43
  %v68 = vpack.c.b16 %v61, %v60
  %v69 = vpack.c.b16 %v63, %v62
  %v70 = vpack.c.b16 %v65, %v64
  %v71 = vpack.c.b16 %v67, %v66
  %v76 = vunpack.c.l.b16 %v44
  %v77 = vunpack.c.l.b16 %v45
  %v78 = vunpack.c.l.b16 %v46
  %v79 = vunpack.c.l.b16 %v47
  %v80 = vpack.c.b16 %v77, %v76
  %v81 = vpack.c.b16 %v79, %v78
  %vm83 = vcmask 228352
  %v85 = vsel %vm83, %v68, 0
  %v88 = vsel %vm83, %v69, 0
  %v91 = vsel %vm83, %v70, 0
  %v94 = vsel %vm83, %v71, 0
  %vm96 = vcmask 1045504
  %v98 = vsel %vm96, %v81, 0
  %100 = vmatprep.subr.bf16.mxu0 0
  %101 = vmatpush1.bf16.msra.mxu0 0
  %102 = vmatprep.subr.bf16.mxu0 0
  %103 = vmatpush1.bf16.msra.mxu0 0
  %104 = vmatprep.subr.bf16.mxu0 0
  %105 = vmatpush1.bf16.msra.mxu0 0
  %106 = vmatprep.subr.bf16.mxu0 0
  %107 = vmatpush1.bf16.msra.mxu0 0
  %108 = vmatprep.subr.bf16.mxu0 0
  %109 = vmatpush1.bf16.msra.mxu0 0
  %110 = vmatprep.subr.bf16.mxu0 0
  %111 = vmatpush1.bf16.msra.mxu0 0
  %112 = vmatprep.subr.bf16.mxu0 0
  %113 = vmatpush1.bf16.msra.mxu0 %v98
  %114 = vmatprep.subr.bf16.mxu0 0
  %115 = vmatpush1.bf16.msra.mxu0 %v80
  %116 = vmatprep.subr.bf16.mxu0 0
  %117 = vmatpush2.bf16.msra.mxu0 0
  %118 = vmatprep.subr.bf16.mxu0 0
  %119 = vmatpush2.bf16.msra.mxu0 0
  %120 = vmatprep.subr.bf16.mxu0 0
  %121 = vmatpush2.bf16.msra.mxu0 0
  %122 = vmatprep.subr.bf16.mxu0 0
  %123 = vmatpush2.bf16.msra.mxu0 0
  %124 = vmatprep.subr.bf16.mxu0 0
  %125 = vmatpush2.bf16.msra.mxu0 0
  %126 = vmatprep.subr.bf16.mxu0 0
  %127 = vmatpush2.bf16.msra.mxu0 0
  %128 = vmatprep.subr.bf16.mxu0 0
  %129 = vmatpush2.bf16.msra.mxu0 0
  %130 = vmatprep.subr.bf16.mxu0 0
  %131 = vmatpush2.bf16.msra.mxu0 0
  %132 = vmatprep.mubr.bf16.mxu0 0
  %133 = vmatmul.mubr.bf16.gmra.mxu0 %v85
  %v134 = vpop.f32.mrf.mxu0
  %v135 = vadd.f32 %v51, %v134
  %v136 = vpop.f32.mrf.mxu0
  %v137 = vpop.f32.mrf.mxu0
  %v138 = vadd.f32 %v51, %v137
  %v139 = vpop.f32.mrf.mxu0
  %140 = vmatprep.mubr.bf16.mxu0 0
  %141 = vmatmul.mubr.bf16.gmra.mxu0 %v88
  %v142 = vpop.f32.mrf.mxu0
  %v143 = vadd.f32 %v51, %v142
  %v144 = vpop.f32.mrf.mxu0
  %v145 = vpop.f32.mrf.mxu0
  %v146 = vadd.f32 %v51, %v145
  %v147 = vpop.f32.mrf.mxu0
  %148 = vmatprep.mubr.bf16.mxu0 0
  %149 = vmatmul.mubr.bf16.gmra.mxu0 %v91
  %v150 = vpop.f32.mrf.mxu0
  %v151 = vadd.f32 %v51, %v150
  %v152 = vpop.f32.mrf.mxu0
  %v153 = vpop.f32.mrf.mxu0
  %v154 = vadd.f32 %v51, %v153
  %v155 = vpop.f32.mrf.mxu0
  %156 = vmatprep.mubr.bf16.mxu0 0
  %157 = vmatmul.mubr.bf16.gmra.mxu0 %v94
  %v158 = vpop.f32.mrf.mxu0
  %v159 = vadd.f32 %v51, %v158
  %v160 = vpop.f32.mrf.mxu0
  %v161 = vpop.f32.mrf.mxu0
  %v162 = vadd.f32 %v51, %v161
  %v163 = vpop.f32.mrf.mxu0
  %164 = vdwg.mxu0
  %v165 = vld [vmem:[%s2] sm:$0xf]
  %v166 = vld [vmem:[%s2 + $0x4] sm:$0xf]
  %v167 = vld [vmem:[%s2 + $0x8] sm:$0xf]
  %v168 = vld [vmem:[%s2 + $0xc] sm:$0xf]
  %v169 = vld [vmem:[%s2 + $0x10] sm:$0xf]
  %v170 = vld [vmem:[%s2 + $0x14] sm:$0xf]
  %v171 = vld [vmem:[%s2 + $0x18] sm:$0xf]
  %v172 = vld [vmem:[%s2 + $0x1c] sm:$0xf]
  %v173 = vld [vmem:[%s2 + $0x20] sm:$0xf]
  %v174 = vld [vmem:[%s2 + $0x24] sm:$0xf]
  %v175 = vld [vmem:[%s2 + $0x28] sm:$0xf]
  %v176 = vld [vmem:[%s2 + $0x2c] sm:$0xf]
  %v177 = vld [vmem:[%s2 + $0x30] sm:$0xf]
  %v178 = vld [vmem:[%s2 + $0x34] sm:$0xf]
  %v179 = vld [vmem:[%s2 + $0x38] sm:$0xf]
  %v180 = vld [vmem:[%s2 + $0x3c] sm:$0xf]
  %v197 = vunpack.c.l.b16 %v165
  %v198 = vunpack.c.l.b16 %v166
  %v199 = vunpack.c.l.b16 %v167
  %v200 = vunpack.c.l.b16 %v168
  %v201 = vunpack.c.l.b16 %v169
  %v202 = vunpack.c.l.b16 %v170
  %v203 = vunpack.c.l.b16 %v171
  %v204 = vunpack.c.l.b16 %v172
  %v205 = vunpack.c.l.b16 %v173
  %v206 = vunpack.c.l.b16 %v174
  %v207 = vunpack.c.l.b16 %v175
  %v208 = vunpack.c.l.b16 %v176
  %v209 = vunpack.c.l.b16 %v177
  %v210 = vunpack.c.l.b16 %v178
  %v211 = vunpack.c.l.b16 %v179
  %v212 = vunpack.c.l.b16 %v180
  %v213 = vpack.c.b16 %v198, %v197
  %v214 = vpack.c.b16 %v200, %v199
  %v215 = vpack.c.b16 %v202, %v201
  %v216 = vpack.c.b16 %v204, %v203
  %v217 = vpack.c.b16 %v206, %v205
  %v218 = vpack.c.b16 %v208, %v207
  %v219 = vpack.c.b16 %v210, %v209
  %v220 = vpack.c.b16 %v212, %v211
  %229 = vmatprep.subr.bf16.mxu0 0
  %230 = vmatpush1.bf16.msra.mxu0 %v220
  %231 = vmatprep.subr.bf16.mxu0 0
  %232 = vmatpush1.bf16.msra.mxu0 %v219
  %233 = vmatprep.subr.bf16.mxu0 0
  %234 = vmatpush1.bf16.msra.mxu0 %v218
  %235 = vmatprep.subr.bf16.mxu0 0
  %236 = vmatpush1.bf16.msra.mxu0 %v217
  %237 = vmatprep.subr.bf16.mxu0 0
  %238 = vmatpush1.bf16.msra.mxu0 %v216
  %239 = vmatprep.subr.bf16.mxu0 0
  %240 = vmatpush1.bf16.msra.mxu0 %v215
  %241 = vmatprep.subr.bf16.mxu0 0
  %242 = vmatpush1.bf16.msra.mxu0 %v214
  %243 = vmatprep.subr.bf16.mxu0 0
  %244 = vmatpush1.bf16.msra.mxu0 %v213
  %245 = vmatprep.subr.bf16.mxu0 0
  %246 = vmatpush2.bf16.msra.mxu0 0
  %247 = vmatprep.subr.bf16.mxu0 0
  %248 = vmatpush2.bf16.msra.mxu0 0
  %249 = vmatprep.subr.bf16.mxu0 0
  %250 = vmatpush2.bf16.msra.mxu0 0
  %251 = vmatprep.subr.bf16.mxu0 0
  %252 = vmatpush2.bf16.msra.mxu0 0
  %253 = vmatprep.subr.bf16.mxu0 0
  %254 = vmatpush2.bf16.msra.mxu0 0
  %255 = vmatprep.subr.bf16.mxu0 0
  %256 = vmatpush2.bf16.msra.mxu0 0
  %257 = vmatprep.subr.bf16.mxu0 0
  %258 = vmatpush2.bf16.msra.mxu0 0
  %259 = vmatprep.subr.bf16.mxu0 0
  %260 = vmatpush2.bf16.msra.mxu0 0
  %261 = vmatprep.mubr.bf16.mxu0 0
  %262 = vmatmul.mubr.bf16.gmra.mxu0 0
  %v263 = vpop.f32.mrf.mxu0
  %v264 = vadd.f32 0.0, %v263
  %v265 = vpop.f32.mrf.mxu0
  %v266 = vpop.f32.mrf.mxu0
  %v267 = vpop.f32.mrf.mxu0
  %268 = vdwg.mxu0
  %v269 = vadd.f32 %v135, %v264
  %v270 = vtanh.pop %v269
  %v271 = vpack.c.bf16 %v270, %v270
  %272 = vmatprep.subr.bf16.mxu0 0
  %273 = vmatpush1.bf16.msra.mxu0 %v220
  %274 = vmatprep.subr.bf16.mxu0 0
  %275 = vmatpush1.bf16.msra.mxu0 %v219
  %276 = vmatprep.subr.bf16.mxu0 0
  %277 = vmatpush1.bf16.msra.mxu0 %v218
  %278 = vmatprep.subr.bf16.mxu0 0
  %279 = vmatpush1.bf16.msra.mxu0 %v217
  %280 = vmatprep.subr.bf16.mxu0 0
  %281 = vmatpush1.bf16.msra.mxu0 %v216
  %282 = vmatprep.subr.bf16.mxu0 0
  %283 = vmatpush1.bf16.msra.mxu0 %v215
  %284 = vmatprep.subr.bf16.mxu0 0
  %285 = vmatpush1.bf16.msra.mxu0 %v214
  %286 = vmatprep.subr.bf16.mxu0 0
  %287 = vmatpush1.bf16.msra.mxu0 %v213
  %288 = vmatprep.subr.bf16.mxu0 0
  %289 = vmatpush2.bf16.msra.mxu0 0
  %290 = vmatprep.subr.bf16.mxu0 0
  %291 = vmatpush2.bf16.msra.mxu0 0
  %292 = vmatprep.subr.bf16.mxu0 0
  %293 = vmatpush2.bf16.msra.mxu0 0
  %294 = vmatprep.subr.bf16.mxu0 0
  %295 = vmatpush2.bf16.msra.mxu0 0
  %296 = vmatprep.subr.bf16.mxu0 0
  %297 = vmatpush2.bf16.msra.mxu0 0
  %298 = vmatprep.subr.bf16.mxu0 0
  %299 = vmatpush2.bf16.msra.mxu0 0
  %300 = vmatprep.subr.bf16.mxu0 0
  %301 = vmatpush2.bf16.msra.mxu0 0
  %302 = vmatprep.subr.bf16.mxu0 0
  %303 = vmatpush2.bf16.msra.mxu0 0
  %304 = vmatprep.mubr.bf16.mxu0 0
  %305 = vmatmul.mubr.bf16.gmra.mxu0 %v271
  %v306 = vpop.f32.mrf.mxu0
  %v307 = vadd.f32 0.0, %v306
  %v308 = vpop.f32.mrf.mxu0
  %v309 = vpop.f32.mrf.mxu0
  %v310 = vpop.f32.mrf.mxu0
  %311 = vdwg.mxu0
  %v312 = vadd.f32 %v138, %v307
  %v313 = vtanh.pop %v312
  %v314 = vpack.c.bf16 %v313, %v313
  %315 = vmatprep.subr.bf16.mxu0 0
  %316 = vmatpush1.bf16.msra.mxu0 %v220
  %317 = vmatprep.subr.bf16.mxu0 0
  %318 = vmatpush1.bf16.msra.mxu0 %v219
  %319 = vmatprep.subr.bf16.mxu0 0
  %320 = vmatpush1.bf16.msra.mxu0 %v218
  %321 = vmatprep.subr.bf16.mxu0 0
  %322 = vmatpush1.bf16.msra.mxu0 %v217
  %323 = vmatprep.subr.bf16.mxu0 0
  %324 = vmatpush1.bf16.msra.mxu0 %v216
  %325 = vmatprep.subr.bf16.mxu0 0
  %326 = vmatpush1.bf16.msra.mxu0 %v215
  %327 = vmatprep.subr.bf16.mxu0 0
  %328 = vmatpush1.bf16.msra.mxu0 %v214
  %329 = vmatprep.subr.bf16.mxu0 0
  %330 = vmatpush1.bf16.msra.mxu0 %v213
  %331 = vmatprep.subr.bf16.mxu0 0
  %332 = vmatpush2.bf16.msra.mxu0 0
  %333 = vmatprep.subr.bf16.mxu0 0
  %334 = vmatpush2.bf16.msra.mxu0 0
  %335 = vmatprep.subr.bf16.mxu0 0
  %336 = vmatpush2.bf16.msra.mxu0 0
  %337 = vmatprep.subr.bf16.mxu0 0
  %338 = vmatpush2.bf16.msra.mxu0 0
  %339 = vmatprep.subr.bf16.mxu0 0
  %340 = vmatpush2.bf16.msra.mxu0 0
  %341 = vmatprep.subr.bf16.mxu0 0
  %342 = vmatpush2.bf16.msra.mxu0 0
  %343 = vmatprep.subr.bf16.mxu0 0
  %344 = vmatpush2.bf16.msra.mxu0 0
  %345 = vmatprep.subr.bf16.mxu0 0
  %346 = vmatpush2.bf16.msra.mxu0 0
  %347 = vmatprep.mubr.bf16.mxu0 0
  %348 = vmatmul.mubr.bf16.gmra.mxu0 %v314
  %v349 = vpop.f32.mrf.mxu0
  %v350 = vadd.f32 0.0, %v349
  %v351 = vpop.f32.mrf.mxu0
  %v352 = vpop.f32.mrf.mxu0
  %v353 = vpop.f32.mrf.mxu0
  %354 = vdwg.mxu0
  %v355 = vadd.f32 %v143, %v350
  %v356 = vtanh.pop %v355
  %v357 = vpack.c.bf16 %v356, %v356
  %358 = vmatprep.subr.bf16.mxu0 0
  %359 = vmatpush1.bf16.msra.mxu0 %v220
  %360 = vmatprep.subr.bf16.mxu0 0
  %361 = vmatpush1.bf16.msra.mxu0 %v219
  %362 = vmatprep.subr.bf16.mxu0 0
  %363 = vmatpush1.bf16.msra.mxu0 %v218
  %364 = vmatprep.subr.bf16.mxu0 0
  %365 = vmatpush1.bf16.msra.mxu0 %v217
  %366 = vmatprep.subr.bf16.mxu0 0
  %367 = vmatpush1.bf16.msra.mxu0 %v216
  %368 = vmatprep.subr.bf16.mxu0 0
  %369 = vmatpush1.bf16.msra.mxu0 %v215
  %370 = vmatprep.subr.bf16.mxu0 0
  %371 = vmatpush1.bf16.msra.mxu0 %v214
  %372 = vmatprep.subr.bf16.mxu0 0
  %373 = vmatpush1.bf16.msra.mxu0 %v213
  %374 = vmatprep.subr.bf16.mxu0 0
  %375 = vmatpush2.bf16.msra.mxu0 0
  %376 = vmatprep.subr.bf16.mxu0 0
  %377 = vmatpush2.bf16.msra.mxu0 0
  %378 = vmatprep.subr.bf16.mxu0 0
  %379 = vmatpush2.bf16.msra.mxu0 0
  %380 = vmatprep.subr.bf16.mxu0 0
  %381 = vmatpush2.bf16.msra.mxu0 0
  %382 = vmatprep.subr.bf16.mxu0 0
  %383 = vmatpush2.bf16.msra.mxu0 0
  %384 = vmatprep.subr.bf16.mxu0 0
  %385 = vmatpush2.bf16.msra.mxu0 0
  %386 = vmatprep.subr.bf16.mxu0 0
  %387 = vmatpush2.bf16.msra.mxu0 0
  %388 = vmatprep.subr.bf16.mxu0 0
  %389 = vmatpush2.bf16.msra.mxu0 0
  %390 = vmatprep.mubr.bf16.mxu0 0
  %391 = vmatmul.mubr.bf16.gmra.mxu0 %v357
  %v392 = vpop.f32.mrf.mxu0
  %v393 = vadd.f32 0.0, %v392
  %v394 = vpop.f32.mrf.mxu0
  %v395 = vpop.f32.mrf.mxu0
  %v396 = vpop.f32.mrf.mxu0
  %397 = vdwg.mxu0
  %v398 = vadd.f32 %v146, %v393
  %v399 = vtanh.pop %v398
  %v400 = vpack.c.bf16 %v399, %v399
  %401 = vmatprep.subr.bf16.mxu0 0
  %402 = vmatpush1.bf16.msra.mxu0 %v220
  %403 = vmatprep.subr.bf16.mxu0 0
  %404 = vmatpush1.bf16.msra.mxu0 %v219
  %405 = vmatprep.subr.bf16.mxu0 0
  %406 = vmatpush1.bf16.msra.mxu0 %v218
  %407 = vmatprep.subr.bf16.mxu0 0
  %408 = vmatpush1.bf16.msra.mxu0 %v217
  %409 = vmatprep.subr.bf16.mxu0 0
  %410 = vmatpush1.bf16.msra.mxu0 %v216
  %411 = vmatprep.subr.bf16.mxu0 0
  %412 = vmatpush1.bf16.msra.mxu0 %v215
  %413 = vmatprep.subr.bf16.mxu0 0
  %414 = vmatpush1.bf16.msra.mxu0 %v214
  %415 = vmatprep.subr.bf16.mxu0 0
  %416 = vmatpush1.bf16.msra.mxu0 %v213
  %417 = vmatprep.subr.bf16.mxu0 0
  %418 = vmatpush2.bf16.msra.mxu0 0
  %419 = vmatprep.subr.bf16.mxu0 0
  %420 = vmatpush2.bf16.msra.mxu0 0
  %421 = vmatprep.subr.bf16.mxu0 0
  %422 = vmatpush2.bf16.msra.mxu0 0
  %423 = vmatprep.subr.bf16.mxu0 0
  %424 = vmatpush2.bf16.msra.mxu0 0
  %425 = vmatprep.subr.bf16.mxu0 0
  %426 = vmatpush2.bf16.msra.mxu0 0
  %427 = vmatprep.subr.bf16.mxu0 0
  %428 = vmatpush2.bf16.msra.mxu0 0
  %429 = vmatprep.subr.bf16.mxu0 0
  %430 = vmatpush2.bf16.msra.mxu0 0
  %431 = vmatprep.subr.bf16.mxu0 0
  %432 = vmatpush2.bf16.msra.mxu0 0
  %433 = vmatprep.mubr.bf16.mxu0 0
  %434 = vmatmul.mubr.bf16.gmra.mxu0 %v400
  %v435 = vpop.f32.mrf.mxu0
  %v436 = vadd.f32 0.0, %v435
  %v437 = vpop.f32.mrf.mxu0
  %v438 = vpop.f32.mrf.mxu0
  %v439 = vpop.f32.mrf.mxu0
  %440 = vdwg.mxu0
  %v441 = vadd.f32 %v151, %v436
  %v442 = vtanh.pop %v441
  %v443 = vpack.c.bf16 %v442, %v442
  %444 = vmatprep.subr.bf16.mxu0 0
  %445 = vmatpush1.bf16.msra.mxu0 %v220
  %446 = vmatprep.subr.bf16.mxu0 0
  %447 = vmatpush1.bf16.msra.mxu0 %v219
  %448 = vmatprep.subr.bf16.mxu0 0
  %449 = vmatpush1.bf16.msra.mxu0 %v218
  %450 = vmatprep.subr.bf16.mxu0 0
  %451 = vmatpush1.bf16.msra.mxu0 %v217
  %452 = vmatprep.subr.bf16.mxu0 0
  %453 = vmatpush1.bf16.msra.mxu0 %v216
  %454 = vmatprep.subr.bf16.mxu0 0
  %455 = vmatpush1.bf16.msra.mxu0 %v215
  %456 = vmatprep.subr.bf16.mxu0 0
  %457 = vmatpush1.bf16.msra.mxu0 %v214
  %458 = vmatprep.subr.bf16.mxu0 0
  %459 = vmatpush1.bf16.msra.mxu0 %v213
  %460 = vmatprep.subr.bf16.mxu0 0
  %461 = vmatpush2.bf16.msra.mxu0 0
  %462 = vmatprep.subr.bf16.mxu0 0
  %463 = vmatpush2.bf16.msra.mxu0 0
  %464 = vmatprep.subr.bf16.mxu0 0
  %465 = vmatpush2.bf16.msra.mxu0 0
  %466 = vmatprep.subr.bf16.mxu0 0
  %467 = vmatpush2.bf16.msra.mxu0 0
  %468 = vmatprep.subr.bf16.mxu0 0
  %469 = vmatpush2.bf16.msra.mxu0 0
  %470 = vmatprep.subr.bf16.mxu0 0
  %471 = vmatpush2.bf16.msra.mxu0 0
  %472 = vmatprep.subr.bf16.mxu0 0
  %473 = vmatpush2.bf16.msra.mxu0 0
  %474 = vmatprep.subr.bf16.mxu0 0
  %475 = vmatpush2.bf16.msra.mxu0 0
  %476 = vmatprep.mubr.bf16.mxu0 0
  %477 = vmatmul.mubr.bf16.gmra.mxu0 %v443
  %v478 = vpop.f32.mrf.mxu0
  %v479 = vadd.f32 0.0, %v478
  %v480 = vpop.f32.mrf.mxu0
  %v481 = vpop.f32.mrf.mxu0
  %v482 = vpop.f32.mrf.mxu0
  %483 = vdwg.mxu0
  %v484 = vadd.f32 %v154, %v479
  %v485 = vtanh.pop %v484
  %v486 = vpack.c.bf16 %v485, %v485
  %487 = vmatprep.subr.bf16.mxu0 0
  %488 = vmatpush1.bf16.msra.mxu0 %v220
  %489 = vmatprep.subr.bf16.mxu0 0
  %490 = vmatpush1.bf16.msra.mxu0 %v219
  %491 = vmatprep.subr.bf16.mxu0 0
  %492 = vmatpush1.bf16.msra.mxu0 %v218
  %493 = vmatprep.subr.bf16.mxu0 0
  %494 = vmatpush1.bf16.msra.mxu0 %v217
  %495 = vmatprep.subr.bf16.mxu0 0
  %496 = vmatpush1.bf16.msra.mxu0 %v216
  %497 = vmatprep.subr.bf16.mxu0 0
  %498 = vmatpush1.bf16.msra.mxu0 %v215
  %499 = vmatprep.subr.bf16.mxu0 0
  %500 = vmatpush1.bf16.msra.mxu0 %v214
  %501 = vmatprep.subr.bf16.mxu0 0
  %502 = vmatpush1.bf16.msra.mxu0 %v213
  %503 = vmatprep.subr.bf16.mxu0 0
  %504 = vmatpush2.bf16.msra.mxu0 0
  %505 = vmatprep.subr.bf16.mxu0 0
  %506 = vmatpush2.bf16.msra.mxu0 0
  %507 = vmatprep.subr.bf16.mxu0 0
  %508 = vmatpush2.bf16.msra.mxu0 0
  %509 = vmatprep.subr.bf16.mxu0 0
  %510 = vmatpush2.bf16.msra.mxu0 0
  %511 = vmatprep.subr.bf16.mxu0 0
  %512 = vmatpush2.bf16.msra.mxu0 0
  %513 = vmatprep.subr.bf16.mxu0 0
  %514 = vmatpush2.bf16.msra.mxu0 0
  %515 = vmatprep.subr.bf16.mxu0 0
  %516 = vmatpush2.bf16.msra.mxu0 0
  %517 = vmatprep.subr.bf16.mxu0 0
  %518 = vmatpush2.bf16.msra.mxu0 0
  %519 = vmatprep.mubr.bf16.mxu0 0
  %520 = vmatmul.mubr.bf16.gmra.mxu0 %v486
  %v521 = vpop.f32.mrf.mxu0
  %v522 = vadd.f32 0.0, %v521
  %v523 = vpop.f32.mrf.mxu0
  %v524 = vpop.f32.mrf.mxu0
  %v525 = vpop.f32.mrf.mxu0
  %526 = vdwg.mxu0
  %v527 = vadd.f32 %v159, %v522
  %v528 = vtanh.pop %v527
  %v529 = vpack.c.bf16 %v528, %v528
  %530 = vmatprep.subr.bf16.mxu0 0
  %531 = vmatpush1.bf16.msra.mxu0 %v220
  %532 = vmatprep.subr.bf16.mxu0 0
  %533 = vmatpush1.bf16.msra.mxu0 %v219
  %534 = vmatprep.subr.bf16.mxu0 0
  %535 = vmatpush1.bf16.msra.mxu0 %v218
  %536 = vmatprep.subr.bf16.mxu0 0
  %537 = vmatpush1.bf16.msra.mxu0 %v217
  %538 = vmatprep.subr.bf16.mxu0 0
  %539 = vmatpush1.bf16.msra.mxu0 %v216
  %540 = vmatprep.subr.bf16.mxu0 0
  %541 = vmatpush1.bf16.msra.mxu0 %v215
  %542 = vmatprep.subr.bf16.mxu0 0
  %543 = vmatpush1.bf16.msra.mxu0 %v214
  %544 = vmatprep.subr.bf16.mxu0 0
  %545 = vmatpush1.bf16.msra.mxu0 %v213
  %546 = vmatprep.subr.bf16.mxu0 0
  %547 = vmatpush2.bf16.msra.mxu0 0
  %548 = vmatprep.subr.bf16.mxu0 0
  %549 = vmatpush2.bf16.msra.mxu0 0
  %550 = vmatprep.subr.bf16.mxu0 0
  %551 = vmatpush2.bf16.msra.mxu0 0
  %552 = vmatprep.subr.bf16.mxu0 0
  %553 = vmatpush2.bf16.msra.mxu0 0
  %554 = vmatprep.subr.bf16.mxu0 0
  %555 = vmatpush2.bf16.msra.mxu0 0
  %556 = vmatprep.subr.bf16.mxu0 0
  %557 = vmatpush2.bf16.msra.mxu0 0
  %558 = vmatprep.subr.bf16.mxu0 0
  %559 = vmatpush2.bf16.msra.mxu0 0
  %560 = vmatprep.subr.bf16.mxu0 0
  %561 = vmatpush2.bf16.msra.mxu0 0
  %562 = vmatprep.mubr.bf16.mxu0 0
  %563 = vmatmul.mubr.bf16.gmra.mxu0 %v529
  %v564 = vpop.f32.mrf.mxu0
  %v565 = vadd.f32 0.0, %v564
  %v566 = vpop.f32.mrf.mxu0
  %v567 = vpop.f32.mrf.mxu0
  %v568 = vpop.f32.mrf.mxu0
  %569 = vdwg.mxu0
  %v570 = vadd.f32 %v162, %v565
  %v571 = vtanh.pop %v570
  %v572 = vlaneseq
  %v573 = vshrl.u32 %v572, 7
  %v574 = vsub.s32 0, %v573
  %v575 = vrot.slane %v19, %v574
  %576 = vmatprep.subr.mxu0 0.0
  %577 = vmatpush1.msra.mxu0 %v35
  %578 = vmatprep.subr.mxu0 0.0
  %579 = vmatpush1.msra.mxu0 %v34
  %580 = vmatprep.subr.mxu0 0.0
  %581 = vmatpush1.msra.mxu0 %v33
  %582 = vmatprep.subr.mxu0 0.0
  %583 = vmatpush1.msra.mxu0 %v32
  %584 = vmatprep.subr.mxu0 0.0
  %585 = vmatpush1.msra.mxu0 %v31
  %586 = vmatprep.subr.mxu0 0.0
  %587 = vmatpush1.msra.mxu0 %v30
  %588 = vmatprep.subr.mxu0 0.0
  %589 = vmatpush1.msra.mxu0 %v29
  %590 = vmatprep.subr.mxu0 0.0
  %591 = vmatpush1.msra.mxu0 %v28
  %592 = vmatprep.subr.mxu0 0.0
  %593 = vmatpush1.msra.mxu0 %v27
  %594 = vmatprep.subr.mxu0 0.0
  %595 = vmatpush1.msra.mxu0 %v26
  %596 = vmatprep.subr.mxu0 0.0
  %597 = vmatpush1.msra.mxu0 %v25
  %598 = vmatprep.subr.mxu0 0.0
  %599 = vmatpush1.msra.mxu0 %v24
  %600 = vmatprep.subr.mxu0 0.0
  %601 = vmatpush1.msra.mxu0 %v23
  %602 = vmatprep.subr.mxu0 0.0
  %603 = vmatpush1.msra.mxu0 %v22
  %604 = vmatprep.subr.mxu0 0.0
  %605 = vmatpush1.msra.mxu0 %v21
  %606 = vmatprep.subr.mxu0 0.0
  %607 = vmatpush1.msra.mxu0 %v20
  %608 = vmatprep.subr.mxu0 0.0
  %609 = vmatpush2.msra.mxu0 0.0
  %610 = vmatprep.subr.mxu0 0.0
  %611 = vmatpush2.msra.mxu0 0.0
  %612 = vmatprep.subr.mxu0 0.0
  %613 = vmatpush2.msra.mxu0 0.0
  %614 = vmatprep.subr.mxu0 0.0
  %615 = vmatpush2.msra.mxu0 0.0
  %616 = vmatprep.subr.mxu0 0.0
  %617 = vmatpush2.msra.mxu0 0.0
  %618 = vmatprep.subr.mxu0 0.0
  %619 = vmatpush2.msra.mxu0 0.0
  %620 = vmatprep.subr.mxu0 0.0
  %621 = vmatpush2.msra.mxu0 0.0
  %622 = vmatprep.subr.mxu0 0.0
  %623 = vmatpush2.msra.mxu0 0.0
  %624 = vmatprep.subr.mxu0 0.0
  %625 = vmatpush2.msra.mxu0 0.0
  %626 = vmatprep.subr.mxu0 0.0
  %627 = vmatpush2.msra.mxu0 0.0
  %628 = vmatprep.subr.mxu0 0.0
  %629 = vmatpush2.msra.mxu0 0.0
  %630 = vmatprep.subr.mxu0 0.0
  %631 = vmatpush2.msra.mxu0 0.0
  %632 = vmatprep.subr.mxu0 0.0
  %633 = vmatpush2.msra.mxu0 0.0
  %634 = vmatprep.subr.mxu0 0.0
  %635 = vmatpush2.msra.mxu0 0.0
  %636 = vmatprep.subr.mxu0 0.0
  %637 = vmatpush2.msra.mxu0 0.0
  %638 = vmatprep.subr.mxu0 0.0
  %639 = vmatpush2.msra.mxu0 0.0
  %640 = vmatprep.mubr.f32.mxu0 0.0
  %641 = vmatmul.mubr.f32.gmra.mxu0 %v571
  %v642 = vpop.f32.mrf.mxu0
  %v643 = vadd.f32 %v575, %v642
  %v644 = vpop.f32.mrf.mxu0
  %645 = vdwg.mxu0
  %646 = vst [vmem:[%s4] sm:$0xff] %v643
  // Predicated region
  $region18: #{rnn_forward.1} parent=0 // pred_check
    _
  $region19: #{rnn_forward.1} parent=0 // pred_check_branch
    %648 = sbr.rel (0) target = $region21
  $region20: #{rnn_forward.1} parent=0 // pred_region
    _
  $region21: #{rnn_forward.1} parent=0 // pred_fallthru
    _
  // Predicated region
  $region22: #{rnn_forward.1} parent=0 // pred_check
    _
  $region23: #{rnn_forward.1} parent=0 // pred_check_branch
    %650 = sbr.rel (0) target = $region25
  $region24: #{rnn_forward.1} parent=0 // pred_region
    _
  $region25: #{rnn_forward.1} parent=0 // pred_fallthru
    _

</llo_original>
